<compile_context>
chip_gen: v6e
topology: v6e:2x2x1
jax: 0.10.0
libtpu: 0.0.40
codegen_flags: <defaults>
</compile_context>

<pallas_src>
import functools

import jax
import jax.numpy as jnp
from jax.experimental import pallas as pl
from jax.experimental.pallas import tpu as pltpu


def temporal_attention_kernel(x_ref, wcat_ref, be_ref, ve_ref, o_ref, *, bblk, T, N):
    # x_ref:    (bblk*T, F*N)   rows = (batch-local, timestep), lanes = (f, n)
    # wcat_ref: (F*N, 2N)       [W1 | W3] fused projection weights
    # be_ref:   (T, T)
    # ve_ref:   (T, T)
    # o_ref:    (1, T, bblk*T)  lane-stacked per-batch (T, T) outputs
    # One MXU matmul replaces the old XLU lane/sublane reductions:
    #   combined[:, :N]  == lhs  rows,  combined[:, N:] == rhs^T rows.
    combined = jnp.dot(x_ref[...], wcat_ref[...],
                       preferred_element_type=jnp.float32)          # (bblk*T, 2N)
    be = be_ref[...]                                                 # (T, T)

    # Per-batch (T, T) attention logits, stacked along lanes -> (T, bblk*T).
    sig_blocks = []
    for b in range(bblk):                                            # static unroll
        blk = combined[b * T:(b + 1) * T, :]                         # (T, 2N)
        lhs_b = blk[:, :N]                                           # (T, N)
        rhsT_b = blk[:, N:]                                          # (T, N)
        prod = jax.lax.dot_general(
            lhs_b, rhsT_b, (((1,), (1,)), ((), ())),
            preferred_element_type=jnp.float32)                      # (T, T)
        z = prod + be
        # sigmoid(z) == 0.5*(1+tanh(z/2)): EUP tanh, no inf intermediates.
        sig_blocks.append(0.5 * (jnp.tanh(0.5 * z) + 1.0))
    S = sig_blocks[0] if bblk == 1 else jnp.concatenate(sig_blocks, axis=1)  # (T, bblk*T)

    # One well-shaped MXU matmul instead of bblk tiny (T,T)@(T,T) products.
    E = jnp.dot(ve_ref[...], S, preferred_element_type=jnp.float32)  # (T, bblk*T)

    # Softmax over torch dim=1 == axis 0 of each per-batch column block.
    E = E - jnp.max(E, axis=0, keepdims=True)
    ex = jnp.exp(E)
    inv = pl.reciprocal(jnp.sum(ex, axis=0, keepdims=True), approx=False)
    o_ref[0] = (ex * inv).astype(o_ref.dtype)


def temporal_attention_forward(x, U_1, U_2, U_3, b_e, V_e, *, batch_block=None):
    B, N, F, T = x.shape
    # Default: fuse the whole batch into one grid step (overhead-bound regime).
    # On v7x one may prefer batch_block = B // 2 so both TensorCores get a step.
    if batch_block is None:
        batch_block = B
    bblk = max(d for d in range(1, min(batch_block, B) + 1) if B % d == 0)
    G = B // bblk

    # Single wrapper-side layout change: (B, N, F, T) -> rows (B*T), lanes (F*N).
    x_flat = jnp.transpose(x, (0, 3, 2, 1)).reshape(B * T, F * N)

    # Fold U_1 / U_3 into one fused weight Wcat (F*N, 2N):
    #   W1[(f,n), m] = U_1[n] * U_2[f, m]        -> lhs  = x_flat @ W1
    #   W3[(f,n), m] = U_3[f] * I[n, m]          -> rhsT = x_flat @ W3
    w1 = (U_2[:, None, :] * U_1[None, :, None]).reshape(F * N, N)
    w3 = (U_3[:, None, None] * jnp.eye(N, dtype=x.dtype)[None, :, :]).reshape(F * N, N)
    wcat = jnp.concatenate([w1, w3], axis=1)                         # (F*N, 2N)

    be = b_e.reshape(T, T)

    kernel = functools.partial(temporal_attention_kernel, bblk=bblk, T=T, N=N)

    cost = pl.CostEstimate(
        flops=B * (2 * T * (F * N) * (2 * N) + 2 * T * T * N + 2 * T * T * T),
        transcendentals=2 * B * T * T,
        bytes_accessed=4 * (x_flat.size + wcat.size + be.size + V_e.size + B * T * T),
    )

    out = pl.pallas_call(
        kernel,
        out_shape=jax.ShapeDtypeStruct((G, T, bblk * T), x.dtype),
        grid_spec=pl.GridSpec(
            grid=(G,),
            in_specs=[
                pl.BlockSpec((bblk * T, F * N), lambda i: (i, 0)),   # x rows for this step
                pl.BlockSpec((F * N, 2 * N), lambda i: (0, 0)),      # Wcat (shared)
                pl.BlockSpec((T, T), lambda i: (0, 0)),              # b_e (shared)
                pl.BlockSpec((T, T), lambda i: (0, 0)),              # V_e (shared)
            ],
            out_specs=pl.BlockSpec((1, T, bblk * T), lambda i: (i, 0, 0)),
        ),
        compiler_params=pltpu.CompilerParams(
            dimension_semantics=("parallel",)),
        cost_estimate=cost,
    )(x_flat, wcat, be, V_e)

    # (G, T, bblk*T): column index = b_local*T + s  ->  (B, T, T)
    out = out.reshape(G, T, bblk, T).transpose(0, 2, 1, 3).reshape(B, T, T)
    return out


def temporal_attention_reference(x, U_1, U_2, U_3, b_e, V_e):
    # Pure-JAX transcription of the torch forward for verification.
    hp = jax.lax.Precision.HIGHEST
    lhs = jnp.matmul(
        jnp.matmul(jnp.transpose(x, (0, 3, 2, 1)), U_1, precision=hp),
        U_2, precision=hp)                                            # (B, T, N)
    rhs = jnp.matmul(jnp.transpose(x, (0, 1, 3, 2)), U_3, precision=hp)  # (B, N, T)
    product = jnp.matmul(lhs, rhs, precision=hp)                      # (B, T, T)
    E = jnp.matmul(V_e, jax.nn.sigmoid(product + b_e), precision=hp)  # (B, T, T)
    E = E - jnp.max(E, axis=1, keepdims=True)
    ex = jnp.exp(E)
    return ex / jnp.sum(ex, axis=1, keepdims=True)


if __name__ == "__main__":
    # batch=2, vertices=16, features=4, timesteps=8
    B, N, F, T = 2, 16, 4, 8

    key = jax.random.PRNGKey(0)
    kx, k1, k2, k3, kb, kv = jax.random.split(key, 6)

    x = jax.random.normal(kx, (B, N, F, T), dtype=jnp.float32)
    U_1 = jax.random.normal(k1, (N,), dtype=jnp.float32)
    U_2 = jax.random.normal(k2, (F, N), dtype=jnp.float32)
    U_3 = jax.random.normal(k3, (F,), dtype=jnp.float32)
    b_e = jax.random.normal(kb, (1, T, T), dtype=jnp.float32)
    V_e = jax.random.normal(kv, (T, T), dtype=jnp.float32)

    out = temporal_attention_forward(x, U_1, U_2, U_3, b_e, V_e)
    out = jax.block_until_ready(out)

    ref = temporal_attention_reference(x, U_1, U_2, U_3, b_e, V_e)
    assert out.shape == (B, T, T)
    # Tolerance covers fp32 reassociation from the fused Wcat MXU matmul
    # (single sum over f,n) vs the reference's two-stage U_1-then-U_2 order.
    assert jnp.allclose(out, ref, atol=2e-4, rtol=2e-4), "mismatch vs reference"
    # sanity: softmax over dim=1 -> columns sum to 1
    assert jnp.allclose(jnp.sum(out, axis=1), 1.0, atol=1e-5)

    print("KERNEL_OK")
</pallas_src>

<mosaic_0001>
module attributes {stable_mosaic.version = 11 : i64} {
  func.func @temporal_attention_kernel(%arg0: i32, %arg1: memref<16x64xf32, #tpu.memory_space<vmem>>, %arg2: memref<64x32xf32, #tpu.memory_space<vmem>>, %arg3: memref<8x8xf32, #tpu.memory_space<vmem>>, %arg4: memref<8x8xf32, #tpu.memory_space<vmem>>, %arg5: memref<1x8x16xf32, #tpu.memory_space<vmem>>) attributes {dimension_semantics = [#tpu.dimension_semantics<parallel>], iteration_bounds = array<i64: 1>, scalar_prefetch = 0 : i64, scratch_operands = 0 : i64, tpu.core_type = #tpu.core_type<tc>, window_params = [{transform_indices = @transform_0, window_bounds = array<i64: 16, 64>}, {pipeline_mode = #tpu.pipeline_mode<synchronous>, transform_indices = @transform_1, window_bounds = array<i64: 64, 32>}, {pipeline_mode = #tpu.pipeline_mode<synchronous>, transform_indices = @transform_2, window_bounds = array<i64: 8, 8>}, {pipeline_mode = #tpu.pipeline_mode<synchronous>, transform_indices = @transform_3, window_bounds = array<i64: 8, 8>}, {transform_indices = @transform_4, window_bounds = array<i64: 1, 8, 16>}]} {
    %c0 = arith.constant 0 : index
    %c0_0 = arith.constant 0 : index
    %0 = vector.load %arg1[%c0, %c0_0] : memref<16x64xf32, #tpu.memory_space<vmem>>, vector<16x64xf32>
    %c0_1 = arith.constant 0 : index
    %c0_2 = arith.constant 0 : index
    %1 = vector.load %arg2[%c0_1, %c0_2] : memref<64x32xf32, #tpu.memory_space<vmem>>, vector<64x32xf32>
    %cst = arith.constant dense<0.000000e+00> : vector<16x32xf32>
    %2 = tpu.matmul %0, %1, %cst {dimension_numbers = #tpu.dot_dimension_numbers<[1], [0], [0], [1], [0, 0, 1, 1], [], []>} : vector<16x64xf32>, vector<64x32xf32>, vector<16x32xf32> -> vector<16x32xf32>
    %c0_3 = arith.constant 0 : index
    %c0_4 = arith.constant 0 : index
    %3 = vector.load %arg3[%c0_3, %c0_4] : memref<8x8xf32, #tpu.memory_space<vmem>>, vector<8x8xf32>
    %4 = vector.extract_strided_slice %2 {offsets = [0, 0], sizes = [8, 32], strides = [1, 1]} : vector<16x32xf32> to vector<8x32xf32>
    %5 = vector.extract_strided_slice %4 {offsets = [0, 0], sizes = [8, 16], strides = [1, 1]} : vector<8x32xf32> to vector<8x16xf32>
    %6 = vector.extract_strided_slice %4 {offsets = [0, 16], sizes = [8, 16], strides = [1, 1]} : vector<8x32xf32> to vector<8x16xf32>
    %cst_5 = arith.constant dense<0.000000e+00> : vector<8x8xf32>
    %7 = tpu.matmul %5, %6, %cst_5 {dimension_numbers = #tpu.dot_dimension_numbers<[1], [1], [0], [0], [0, 0, 1, 0], [], []>} : vector<8x16xf32>, vector<8x16xf32>, vector<8x8xf32> -> vector<8x8xf32>
    %8 = arith.addf %7, %3 : vector<8x8xf32>
    %cst_6 = arith.constant 5.000000e-01 : f32
    %9 = vector.broadcast %cst_6 : f32 to vector<8x8xf32>
    %10 = arith.mulf %9, %8 : vector<8x8xf32>
    %11 = math.tanh %10 : vector<8x8xf32>
    %cst_7 = arith.constant 1.000000e+00 : f32
    %12 = vector.broadcast %cst_7 : f32 to vector<8x8xf32>
    %13 = arith.addf %11, %12 : vector<8x8xf32>
    %cst_8 = arith.constant 5.000000e-01 : f32
    %14 = vector.broadcast %cst_8 : f32 to vector<8x8xf32>
    %15 = arith.mulf %14, %13 : vector<8x8xf32>
    %16 = vector.extract_strided_slice %2 {offsets = [8, 0], sizes = [8, 32], strides = [1, 1]} : vector<16x32xf32> to vector<8x32xf32>
    %17 = vector.extract_strided_slice %16 {offsets = [0, 0], sizes = [8, 16], strides = [1, 1]} : vector<8x32xf32> to vector<8x16xf32>
    %18 = vector.extract_strided_slice %16 {offsets = [0, 16], sizes = [8, 16], strides = [1, 1]} : vector<8x32xf32> to vector<8x16xf32>
    %cst_9 = arith.constant dense<0.000000e+00> : vector<8x8xf32>
    %19 = tpu.matmul %17, %18, %cst_9 {dimension_numbers = #tpu.dot_dimension_numbers<[1], [1], [0], [0], [0, 0, 1, 0], [], []>} : vector<8x16xf32>, vector<8x16xf32>, vector<8x8xf32> -> vector<8x8xf32>
    %20 = arith.addf %19, %3 : vector<8x8xf32>
    %cst_10 = arith.constant 5.000000e-01 : f32
    %21 = vector.broadcast %cst_10 : f32 to vector<8x8xf32>
    %22 = arith.mulf %21, %20 : vector<8x8xf32>
    %23 = math.tanh %22 : vector<8x8xf32>
    %cst_11 = arith.constant 1.000000e+00 : f32
    %24 = vector.broadcast %cst_11 : f32 to vector<8x8xf32>
    %25 = arith.addf %23, %24 : vector<8x8xf32>
    %cst_12 = arith.constant 5.000000e-01 : f32
    %26 = vector.broadcast %cst_12 : f32 to vector<8x8xf32>
    %27 = arith.mulf %26, %25 : vector<8x8xf32>
    %28 = tpu.concatenate %15, %27 in 1 : vector<8x8xf32>, vector<8x8xf32> -> vector<8x16xf32>
    %c0_13 = arith.constant 0 : index
    %c0_14 = arith.constant 0 : index
    %29 = vector.load %arg4[%c0_13, %c0_14] : memref<8x8xf32, #tpu.memory_space<vmem>>, vector<8x8xf32>
    %cst_15 = arith.constant dense<0.000000e+00> : vector<8x16xf32>
    %30 = tpu.matmul %29, %28, %cst_15 {dimension_numbers = #tpu.dot_dimension_numbers<[1], [0], [0], [1], [0, 0, 1, 1], [], []>} : vector<8x8xf32>, vector<8x16xf32>, vector<8x16xf32> -> vector<8x16xf32>
    %cst_16 = arith.constant dense<0xFF800000> : vector<16xf32>
    %31 = vector.multi_reduction <maximumf>, %30, %cst_16 [0] : vector<8x16xf32> to vector<16xf32>
    %32 = vector.shape_cast %31 : vector<16xf32> to vector<1x16xf32>
    %33 = vector.broadcast %32 : vector<1x16xf32> to vector<8x16xf32>
    %34 = arith.subf %30, %33 : vector<8x16xf32>
    %35 = math.exp %34 : vector<8x16xf32>
    %cst_17 = arith.constant dense<0.000000e+00> : vector<16xf32>
    %36 = vector.multi_reduction <add>, %35, %cst_17 [0] : vector<8x16xf32> to vector<16xf32>
    %37 = vector.shape_cast %36 : vector<16xf32> to vector<1x16xf32>
    %38 = tpu.reciprocal %37 : vector<1x16xf32> -> vector<1x16xf32>
    %39 = vector.broadcast %38 : vector<1x16xf32> to vector<8x16xf32>
    %40 = arith.mulf %35, %39 : vector<8x16xf32>
    %c0_18 = arith.constant 0 : index
    %c0_19 = arith.constant 0 : index
    %c0_20 = arith.constant 0 : index
    %41 = vector.load %arg5[%c0_18, %c0_19, %c0_20] : memref<1x8x16xf32, #tpu.memory_space<vmem>>, vector<1x8x16xf32>
    %42 = vector.shape_cast %41 : vector<1x8x16xf32> to vector<8x16xf32>
    %43 = vector.shape_cast %40 : vector<8x16xf32> to vector<1x8x16xf32>
    tpu.vector_store %arg5[%c0_18, %c0_19, %c0_20], %43 {strides = array<i32>} : memref<1x8x16xf32, #tpu.memory_space<vmem>>, vector<1x8x16xf32>,
    return
  }
  func.func @transform_0(%arg0: i32) -> (i32, i32) {
    %c0_i32 = arith.constant 0 : i32
    %c0_i32_0 = arith.constant 0 : i32
    return %arg0, %c0_i32 : i32, i32
  }
  func.func @transform_1(%arg0: i32) -> (i32, i32) {
    %c0_i32 = arith.constant 0 : i32
    %c0_i32_0 = arith.constant 0 : i32
    %c0_i32_1 = arith.constant 0 : i32
    return %c0_i32, %c0_i32_0 : i32, i32
  }
  func.func @transform_2(%arg0: i32) -> (i32, i32) {
    %c0_i32 = arith.constant 0 : i32
    %c0_i32_0 = arith.constant 0 : i32
    %c0_i32_1 = arith.constant 0 : i32
    return %c0_i32, %c0_i32_0 : i32, i32
  }
  func.func @transform_3(%arg0: i32) -> (i32, i32) {
    %c0_i32 = arith.constant 0 : i32
    %c0_i32_0 = arith.constant 0 : i32
    %c0_i32_1 = arith.constant 0 : i32
    return %c0_i32, %c0_i32_0 : i32, i32
  }
  func.func @transform_4(%arg0: i32) -> (i32, i32, i32) {
    %c0_i32 = arith.constant 0 : i32
    %c0_i32_0 = arith.constant 0 : i32
    %c0_i32_1 = arith.constant 0 : i32
    return %arg0, %c0_i32, %c0_i32_0 : i32, i32, i32
  }
}

</mosaic_0001>

<llo_original>
// kernel: tpu_custom_call.1
$region0: #{tpu_custom_call.1}
  #allocation0 [shape = 'u32[]', space=smem, size = 0x4, offset = 0x4, fixed_abs, tag = 'smem constant byte address 0x4 - core index']
  #allocation1 [shape = 'u32[144,128]{1,0:T(1,128)}', space=vmem, size = 0x12000, scoped, tag = 'internal scratch']
  %s0 = inlined_call_operand.vmem [shape: f32[16,64], index: 0, kind: input, shape index: {}]
  %s1 = inlined_call_operand.vmem [shape: f32[64,32], index: 1, kind: input, shape index: {}]
  %s2 = inlined_call_operand.vmem [shape: f32[8,8], index: 2, kind: input, shape index: {}]
  %s3 = inlined_call_operand.vmem [shape: f32[8,8], index: 3, kind: input, shape index: {}]
  %s4 = inlined_call_operand.hbm [shape: f32[1,8,16], index: 4, kind: output, shape index: {}]
  %s5 = sld [smem:[#allocation0]]
  $region26: #{tpu_custom_call.1} parent=0
    _
  %s7 = ssub.s32 1, %s5
  %s8 = scalar_select 0, %s7, %s5
  $region1: #{tpu_custom_call.1} parent=0
    #allocation2 [shape = 'u8[4096]{0}', space=vmem, size = 0x1000, scoped, tag = 'output window, operand 0, single buffered']
    #allocation3 [shape = 's32[1]{0}', space=sflag, size = 0x4, scoped, tag = 'scoped memory for tpu_custom_call.1']
    %9 = vsyncpa [#allocation3], 0
    // Predicated region
    $region2: #{tpu_custom_call.1} parent=1 // pred_check
      _
    $region3: #{tpu_custom_call.1} parent=1 // pred_check_branch
      %11 = sbr.rel (0) target = $region5
    $region4: #{tpu_custom_call.1} parent=1 // pred_region
      _
    $region5: #{tpu_custom_call.1} parent=1 // pred_fallthru
      _
    // Predicated region
    $region6: #{tpu_custom_call.1} parent=1 // pred_check
      _
    $region7: #{tpu_custom_call.1} parent=1 // pred_check_branch
      %13 = sbr.rel (0) target = $region9
    $region8: #{tpu_custom_call.1} parent=1 // pred_region
      _
    $region9: #{tpu_custom_call.1} parent=1 // pred_fallthru
      _
    // Predicated region
    $region10: #{tpu_custom_call.1} parent=1 // pred_check
      _
    $region11: #{tpu_custom_call.1} parent=1 // pred_check_branch
      %15 = sbr.rel (0) target = $region13
    $region12: #{tpu_custom_call.1} parent=1 // pred_region
      _
    $region13: #{tpu_custom_call.1} parent=1 // pred_fallthru
      _
    // Predicated region
    $region14: #{tpu_custom_call.1} parent=1 // pred_check
      _
    $region15: #{tpu_custom_call.1} parent=1 // pred_check_branch
      %17 = sbr.rel (0) target = $region17
    $region16: #{tpu_custom_call.1} parent=1 // pred_region
      _
    $region17: #{tpu_custom_call.1} parent=1 // pred_fallthru
      _
    %v18 = vld [vmem:[%s0] sm:$0xff]
    %v19 = vld [vmem:[%s0 + $0x8] sm:$0xff]
    %v20 = vld [vmem:[%s1] sm:$0xff]
    %v21 = vld [vmem:[%s1 + $0x8] sm:$0xff]
    %v22 = vld [vmem:[%s1 + $0x10] sm:$0xff]
    %v23 = vld [vmem:[%s1 + $0x18] sm:$0xff]
    %v24 = vld [vmem:[%s1 + $0x20] sm:$0xff]
    %v25 = vld [vmem:[%s1 + $0x28] sm:$0xff]
    %v26 = vld [vmem:[%s1 + $0x30] sm:$0xff]
    %v27 = vld [vmem:[%s1 + $0x38] sm:$0xff]
    %vm28 = vcmask 523264
    %v30 = vsel %vm28, %v18, 0
    %v33 = vsel %vm28, %v19, 0
    %35 = vmatprep.subr.mxu0 0.0
    %36 = vmatpush1.msra.mxu0 0.0
    %37 = vmatprep.subr.mxu0 0.0
    %38 = vmatpush1.msra.mxu0 0.0
    %39 = vmatprep.subr.mxu0 0.0
    %40 = vmatpush1.msra.mxu0 0.0
    %41 = vmatprep.subr.mxu0 0.0
    %42 = vmatpush1.msra.mxu0 0.0
    %43 = vmatprep.subr.mxu0 0.0
    %44 = vmatpush1.msra.mxu0 0.0
    %45 = vmatprep.subr.mxu0 0.0
    %46 = vmatpush1.msra.mxu0 0.0
    %47 = vmatprep.subr.mxu0 0.0
    %48 = vmatpush1.msra.mxu0 0.0
    %49 = vmatprep.subr.mxu0 0.0
    %50 = vmatpush1.msra.mxu0 0.0
    %51 = vmatprep.subr.mxu0 0.0
    %52 = vmatpush1.msra.mxu0 %v27
    %53 = vmatprep.subr.mxu0 0.0
    %54 = vmatpush1.msra.mxu0 %v26
    %55 = vmatprep.subr.mxu0 0.0
    %56 = vmatpush1.msra.mxu0 %v25
    %57 = vmatprep.subr.mxu0 0.0
    %58 = vmatpush1.msra.mxu0 %v24
    %59 = vmatprep.subr.mxu0 0.0
    %60 = vmatpush1.msra.mxu0 %v23
    %61 = vmatprep.subr.mxu0 0.0
    %62 = vmatpush1.msra.mxu0 %v22
    %63 = vmatprep.subr.mxu0 0.0
    %64 = vmatpush1.msra.mxu0 %v21
    %65 = vmatprep.subr.mxu0 0.0
    %66 = vmatpush1.msra.mxu0 %v20
    %67 = vmatprep.subr.mxu0 0.0
    %68 = vmatpush2.msra.mxu0 0.0
    %69 = vmatprep.subr.mxu0 0.0
    %70 = vmatpush2.msra.mxu0 0.0
    %71 = vmatprep.subr.mxu0 0.0
    %72 = vmatpush2.msra.mxu0 0.0
    %73 = vmatprep.subr.mxu0 0.0
    %74 = vmatpush2.msra.mxu0 0.0
    %75 = vmatprep.subr.mxu0 0.0
    %76 = vmatpush2.msra.mxu0 0.0
    %77 = vmatprep.subr.mxu0 0.0
    %78 = vmatpush2.msra.mxu0 0.0
    %79 = vmatprep.subr.mxu0 0.0
    %80 = vmatpush2.msra.mxu0 0.0
    %81 = vmatprep.subr.mxu0 0.0
    %82 = vmatpush2.msra.mxu0 0.0
    %83 = vmatprep.subr.mxu0 0.0
    %84 = vmatpush2.msra.mxu0 0.0
    %85 = vmatprep.subr.mxu0 0.0
    %86 = vmatpush2.msra.mxu0 0.0
    %87 = vmatprep.subr.mxu0 0.0
    %88 = vmatpush2.msra.mxu0 0.0
    %89 = vmatprep.subr.mxu0 0.0
    %90 = vmatpush2.msra.mxu0 0.0
    %91 = vmatprep.subr.mxu0 0.0
    %92 = vmatpush2.msra.mxu0 0.0
    %93 = vmatprep.subr.mxu0 0.0
    %94 = vmatpush2.msra.mxu0 0.0
    %95 = vmatprep.subr.mxu0 0.0
    %96 = vmatpush2.msra.mxu0 0.0
    %97 = vmatprep.subr.mxu0 0.0
    %98 = vmatpush2.msra.mxu0 0.0
    %99 = vmatprep.mubr.f32.mxu0 0.0
    %100 = vmatmul.mubr.f32.gmra.mxu0 %v30
    %v101 = vpop.f32.mrf.mxu0
    %v102 = vadd.f32 0.0, %v101
    %v103 = vpop.f32.mrf.mxu0
    %104 = vmatprep.mubr.f32.mxu0 0.0
    %105 = vmatmul.mubr.f32.gmra.mxu0 %v33
    %v106 = vpop.f32.mrf.mxu0
    %v107 = vadd.f32 0.0, %v106
    %v108 = vpop.f32.mrf.mxu0
    %109 = vdwg.mxu0
    %v110 = vld [vmem:[%s2] sm:$0xff]
    %112 = vrot.lane.b32.xlu0 %v102, 112
    %v113 = vpop.permute.xlu0 %112
    %vm114 = vcmask 130048
    %v115 = vsel %vm114, %v102, 0
    %v117 = vsel %vm114, %v113, 0
    %119 = vmatprep.subr.mxu0 0.0
    %120 = vmatpush1.xpose.msra.mxu0 0.0
    %121 = vmatprep.subr.mxu0 0.0
    %122 = vmatpush1.xpose.msra.mxu0 0.0
    %123 = vmatprep.subr.mxu0 0.0
    %124 = vmatpush1.xpose.msra.mxu0 0.0
    %125 = vmatprep.subr.mxu0 0.0
    %126 = vmatpush1.xpose.msra.mxu0 0.0
    %127 = vmatprep.subr.mxu0 0.0
    %128 = vmatpush1.xpose.msra.mxu0 0.0
    %129 = vmatprep.subr.mxu0 0.0
    %130 = vmatpush1.xpose.msra.mxu0 0.0
    %131 = vmatprep.subr.mxu0 0.0
    %132 = vmatpush1.xpose.msra.mxu0 0.0
    %133 = vmatprep.subr.mxu0 0.0
    %134 = vmatpush1.xpose.msra.mxu0 0.0
    %135 = vmatprep.subr.mxu0 0.0
    %136 = vmatpush1.xpose.msra.mxu0 0.0
    %137 = vmatprep.subr.mxu0 0.0
    %138 = vmatpush1.xpose.msra.mxu0 0.0
    %139 = vmatprep.subr.mxu0 0.0
    %140 = vmatpush1.xpose.msra.mxu0 0.0
    %141 = vmatprep.subr.mxu0 0.0
    %142 = vmatpush1.xpose.msra.mxu0 0.0
    %143 = vmatprep.subr.mxu0 0.0
    %144 = vmatpush1.xpose.msra.mxu0 0.0
    %145 = vmatprep.subr.mxu0 0.0
    %146 = vmatpush1.xpose.msra.mxu0 0.0
    %147 = vmatprep.subr.mxu0 0.0
    %148 = vmatpush1.xpose.msra.mxu0 0.0
    %149 = vmatprep.subr.mxu0 0.0
    %150 = vmatpush1.xpose.msra.mxu0 %v117
    %151 = vmatprep.subr.mxu0 0.0
    %152 = vmatpush2.xpose.msra.mxu0 0.0
    %153 = vmatprep.subr.mxu0 0.0
    %154 = vmatpush2.xpose.msra.mxu0 0.0
    %155 = vmatprep.subr.mxu0 0.0
    %156 = vmatpush2.xpose.msra.mxu0 0.0
    %157 = vmatprep.subr.mxu0 0.0
    %158 = vmatpush2.xpose.msra.mxu0 0.0
    %159 = vmatprep.subr.mxu0 0.0
    %160 = vmatpush2.xpose.msra.mxu0 0.0
    %161 = vmatprep.subr.mxu0 0.0
    %162 = vmatpush2.xpose.msra.mxu0 0.0
    %163 = vmatprep.subr.mxu0 0.0
    %164 = vmatpush2.xpose.msra.mxu0 0.0
    %165 = vmatprep.subr.mxu0 0.0
    %166 = vmatpush2.xpose.msra.mxu0 0.0
    %167 = vmatprep.subr.mxu0 0.0
    %168 = vmatpush2.xpose.msra.mxu0 0.0
    %169 = vmatprep.subr.mxu0 0.0
    %170 = vmatpush2.xpose.msra.mxu0 0.0
    %171 = vmatprep.subr.mxu0 0.0
    %172 = vmatpush2.xpose.msra.mxu0 0.0
    %173 = vmatprep.subr.mxu0 0.0
    %174 = vmatpush2.xpose.msra.mxu0 0.0
    %175 = vmatprep.subr.mxu0 0.0
    %176 = vmatpush2.xpose.msra.mxu0 0.0
    %177 = vmatprep.subr.mxu0 0.0
    %178 = vmatpush2.xpose.msra.mxu0 0.0
    %179 = vmatprep.subr.mxu0 0.0
    %180 = vmatpush2.xpose.msra.mxu0 0.0
    %181 = vmatprep.subr.mxu0 0.0
    %182 = vmatpush2.xpose.msra.mxu0 0.0
    %183 = vmatprep.mubr.f32.mxu0 0.0
    %184 = vmatmul.mubr.f32.gmra.mxu0 %v115
    %v185 = vpop.f32.mrf.mxu0
    %v186 = vadd.f32 %v110, %v185
    %v187 = vpop.f32.mrf.mxu0
    %188 = vdwg.mxu0
    %v189 = vmul.f32 %v186, 0.5
    %v190 = vtanh.pop %v189
    %v191 = vadd.f32 %v190, 1.0
    %v192 = vmul.f32 %v191, 0.5
    %194 = vrot.lane.b32.xlu0 %v107, 112
    %v195 = vpop.permute.xlu0 %194
    %v196 = vsel %vm114, %v107, 0
    %v198 = vsel %vm114, %v195, 0
    %200 = vmatprep.subr.mxu0 0.0
    %201 = vmatpush1.xpose.msra.mxu0 0.0
    %202 = vmatprep.subr.mxu0 0.0
    %203 = vmatpush1.xpose.msra.mxu0 0.0
    %204 = vmatprep.subr.mxu0 0.0
    %205 = vmatpush1.xpose.msra.mxu0 0.0
    %206 = vmatprep.subr.mxu0 0.0
    %207 = vmatpush1.xpose.msra.mxu0 0.0
    %208 = vmatprep.subr.mxu0 0.0
    %209 = vmatpush1.xpose.msra.mxu0 0.0
    %210 = vmatprep.subr.mxu0 0.0
    %211 = vmatpush1.xpose.msra.mxu0 0.0
    %212 = vmatprep.subr.mxu0 0.0
    %213 = vmatpush1.xpose.msra.mxu0 0.0
    %214 = vmatprep.subr.mxu0 0.0
    %215 = vmatpush1.xpose.msra.mxu0 0.0
    %216 = vmatprep.subr.mxu0 0.0
    %217 = vmatpush1.xpose.msra.mxu0 0.0
    %218 = vmatprep.subr.mxu0 0.0
    %219 = vmatpush1.xpose.msra.mxu0 0.0
    %220 = vmatprep.subr.mxu0 0.0
    %221 = vmatpush1.xpose.msra.mxu0 0.0
    %222 = vmatprep.subr.mxu0 0.0
    %223 = vmatpush1.xpose.msra.mxu0 0.0
    %224 = vmatprep.subr.mxu0 0.0
    %225 = vmatpush1.xpose.msra.mxu0 0.0
    %226 = vmatprep.subr.mxu0 0.0
    %227 = vmatpush1.xpose.msra.mxu0 0.0
    %228 = vmatprep.subr.mxu0 0.0
    %229 = vmatpush1.xpose.msra.mxu0 0.0
    %230 = vmatprep.subr.mxu0 0.0
    %231 = vmatpush1.xpose.msra.mxu0 %v198
    %232 = vmatprep.subr.mxu0 0.0
    %233 = vmatpush2.xpose.msra.mxu0 0.0
    %234 = vmatprep.subr.mxu0 0.0
    %235 = vmatpush2.xpose.msra.mxu0 0.0
    %236 = vmatprep.subr.mxu0 0.0
    %237 = vmatpush2.xpose.msra.mxu0 0.0
    %238 = vmatprep.subr.mxu0 0.0
    %239 = vmatpush2.xpose.msra.mxu0 0.0
    %240 = vmatprep.subr.mxu0 0.0
    %241 = vmatpush2.xpose.msra.mxu0 0.0
    %242 = vmatprep.subr.mxu0 0.0
    %243 = vmatpush2.xpose.msra.mxu0 0.0
    %244 = vmatprep.subr.mxu0 0.0
    %245 = vmatpush2.xpose.msra.mxu0 0.0
    %246 = vmatprep.subr.mxu0 0.0
    %247 = vmatpush2.xpose.msra.mxu0 0.0
    %248 = vmatprep.subr.mxu0 0.0
    %249 = vmatpush2.xpose.msra.mxu0 0.0
    %250 = vmatprep.subr.mxu0 0.0
    %251 = vmatpush2.xpose.msra.mxu0 0.0
    %252 = vmatprep.subr.mxu0 0.0
    %253 = vmatpush2.xpose.msra.mxu0 0.0
    %254 = vmatprep.subr.mxu0 0.0
    %255 = vmatpush2.xpose.msra.mxu0 0.0
    %256 = vmatprep.subr.mxu0 0.0
    %257 = vmatpush2.xpose.msra.mxu0 0.0
    %258 = vmatprep.subr.mxu0 0.0
    %259 = vmatpush2.xpose.msra.mxu0 0.0
    %260 = vmatprep.subr.mxu0 0.0
    %261 = vmatpush2.xpose.msra.mxu0 0.0
    %262 = vmatprep.subr.mxu0 0.0
    %263 = vmatpush2.xpose.msra.mxu0 0.0
    %264 = vmatprep.mubr.f32.mxu0 0.0
    %265 = vmatmul.mubr.f32.gmra.mxu0 %v196
    %v266 = vpop.f32.mrf.mxu0
    %v267 = vadd.f32 %v110, %v266
    %v268 = vpop.f32.mrf.mxu0
    %269 = vdwg.mxu0
    %v270 = vmul.f32 %v267, 0.5
    %v271 = vtanh.pop %v270
    %v272 = vadd.f32 %v271, 1.0
    %v273 = vmul.f32 %v272, 0.5
    %275 = vrot.lane.b32.xlu0 %v273, 8
    %v276 = vpop.permute.xlu0 %275
    %vm278 = vcmask 64512
    %v279 = vsel %vm278, %v192, %v276
    %v280 = vld [vmem:[%s3] sm:$0xff]
    %v282 = vsel %vm278, %v280, 0
    %284 = vmatprep.subr.mxu0 0.0
    %285 = vmatpush1.msra.mxu0 0.0
    %286 = vmatprep.subr.mxu0 0.0
    %287 = vmatpush1.msra.mxu0 0.0
    %288 = vmatprep.subr.mxu0 0.0
    %289 = vmatpush1.msra.mxu0 0.0
    %290 = vmatprep.subr.mxu0 0.0
    %291 = vmatpush1.msra.mxu0 0.0
    %292 = vmatprep.subr.mxu0 0.0
    %293 = vmatpush1.msra.mxu0 0.0
    %294 = vmatprep.subr.mxu0 0.0
    %295 = vmatpush1.msra.mxu0 0.0
    %296 = vmatprep.subr.mxu0 0.0
    %297 = vmatpush1.msra.mxu0 0.0
    %298 = vmatprep.subr.mxu0 0.0
    %299 = vmatpush1.msra.mxu0 0.0
    %300 = vmatprep.subr.mxu0 0.0
    %301 = vmatpush1.msra.mxu0 0.0
    %302 = vmatprep.subr.mxu0 0.0
    %303 = vmatpush1.msra.mxu0 0.0
    %304 = vmatprep.subr.mxu0 0.0
    %305 = vmatpush1.msra.mxu0 0.0
    %306 = vmatprep.subr.mxu0 0.0
    %307 = vmatpush1.msra.mxu0 0.0
    %308 = vmatprep.subr.mxu0 0.0
    %309 = vmatpush1.msra.mxu0 0.0
    %310 = vmatprep.subr.mxu0 0.0
    %311 = vmatpush1.msra.mxu0 0.0
    %312 = vmatprep.subr.mxu0 0.0
    %313 = vmatpush1.msra.mxu0 0.0
    %314 = vmatprep.subr.mxu0 0.0
    %315 = vmatpush1.msra.mxu0 %v279
    %316 = vmatprep.subr.mxu0 0.0
    %317 = vmatpush2.msra.mxu0 0.0
    %318 = vmatprep.subr.mxu0 0.0
    %319 = vmatpush2.msra.mxu0 0.0
    %320 = vmatprep.subr.mxu0 0.0
    %321 = vmatpush2.msra.mxu0 0.0
    %322 = vmatprep.subr.mxu0 0.0
    %323 = vmatpush2.msra.mxu0 0.0
    %324 = vmatprep.subr.mxu0 0.0
    %325 = vmatpush2.msra.mxu0 0.0
    %326 = vmatprep.subr.mxu0 0.0
    %327 = vmatpush2.msra.mxu0 0.0
    %328 = vmatprep.subr.mxu0 0.0
    %329 = vmatpush2.msra.mxu0 0.0
    %330 = vmatprep.subr.mxu0 0.0
    %331 = vmatpush2.msra.mxu0 0.0
    %332 = vmatprep.subr.mxu0 0.0
    %333 = vmatpush2.msra.mxu0 0.0
    %334 = vmatprep.subr.mxu0 0.0
    %335 = vmatpush2.msra.mxu0 0.0
    %336 = vmatprep.subr.mxu0 0.0
    %337 = vmatpush2.msra.mxu0 0.0
    %338 = vmatprep.subr.mxu0 0.0
    %339 = vmatpush2.msra.mxu0 0.0
    %340 = vmatprep.subr.mxu0 0.0
    %341 = vmatpush2.msra.mxu0 0.0
    %342 = vmatprep.subr.mxu0 0.0
    %343 = vmatpush2.msra.mxu0 0.0
    %344 = vmatprep.subr.mxu0 0.0
    %345 = vmatpush2.msra.mxu0 0.0
    %346 = vmatprep.subr.mxu0 0.0
    %347 = vmatpush2.msra.mxu0 0.0
    %348 = vmatprep.mubr.f32.mxu0 0.0
    %349 = vmatmul.mubr.f32.gmra.mxu0 %v282
    %v350 = vpop.f32.mrf.mxu0
    %v351 = vadd.f32 0.0, %v350
    %v352 = vpop.f32.mrf.mxu0
    %353 = vdwg.mxu0
    %v354 = vsel %vm114, %v351, -inf
    %v355 = vrot.slane %v354, 4
    %v356 = vmax.f32 %v354, %v355
    %v357 = vrot.slane %v356, 2
    %v358 = vmax.f32 %v356, %v357
    %v359 = vrot.slane %v358, 1
    %v360 = vmax.f32 %v358, %v359
    %v361 = vsub.f32 %v351, %v360
    %v362 = vmul.f32 %v361, 1.442695
    %v363 = vpow.pop %v362
    %v364 = vsel %vm114, %v363, 0.0
    %v365 = vrot.slane %v364, 4
    %v366 = vadd.f32 %v364, %v365
    %v367 = vrot.slane %v366, 2
    %v368 = vadd.f32 %v366, %v367
    %v369 = vrot.slane %v368, 1
    %v370 = vadd.f32 %v368, %v369
    %v371 = vrcp.pop %v370
    %v372 = vmul.f32 %v363, %v371
    %373 = vst.msk [vmem:[#allocation2] sm:$0xff] %vm114, %v372
    // Predicated region
    $region18: #{tpu_custom_call.1} parent=1 // pred_check
      _
    $region19: #{tpu_custom_call.1} parent=1 // pred_check_branch
      %375 = sbr.rel (0) target = $region21
    $region20: #{tpu_custom_call.1} parent=1 // pred_region
      %s377 = ssub.s32 128, 128
      %378 = vsyncadd [#allocation3], %s377
      %s380 = sshll.u32 [#allocation2], 4
      %s381 = int_to_ptr.vmem [resolvable:$true] %s380
      %383 = dma.vmem_to_hbm [thread:$0]  %s381, 128, %s4, [#allocation3]
    $region21: #{tpu_custom_call.1} parent=1 // pred_fallthru
      _
    // Predicated region
    $region22: #{tpu_custom_call.1} parent=1 // pred_check
      _
    $region23: #{tpu_custom_call.1} parent=1 // pred_check_branch
      %385 = sbr.rel (0) target = $region25
    $region24: #{tpu_custom_call.1} parent=1 // pred_region
      %386 = dma.done [#allocation3], 128
    $region25: #{tpu_custom_call.1} parent=1 // pred_fallthru
      _
    %387 = vsyncpa [#allocation3], 1

</llo_original>
